<compile_context>
chip_gen: v7x
topology: tpu7x:2x2x1
jax: 0.10.0
libtpu: 0.0.40
codegen_flags: <defaults>
</compile_context>

<pallas_src>
import jax
import jax.numpy as jnp
from jax.experimental import pallas as pl
from jax.experimental.pallas import tpu as pltpu


def _round_up(a, b):
    return (a + b - 1) // b * b


def _make_kernel(L, tl, inv_c):
    """Build the kernel with static L / tl / 1/C closed over."""

    def kernel(w_ref, x_ref, halo_ref, o_ref):
        # w_ref:    (6,)         SMEM f32  [w00, w01, w02, w10, w11, w12]   (w[ch, tap])
        # x_ref:    (bn, C, tl)  VMEM      one lane tile of bn batch rows
        # halo_ref: (bn, 1, 2)   VMEM f32  conv-weighted [left, right] halo taps
        # o_ref:    (bn, C, tl)  VMEM
        f32 = jnp.float32
        xin = x_ref[...]                                        # (bn, C, tl), I/O dtype

        # Channel reductions for the gate; f32 accumulation, no block-sized f32 copy.
        avg = jnp.sum(xin, axis=1, dtype=f32) * inv_c           # (bn, tl)
        mx = jnp.max(xin, axis=1).astype(f32)                   # (bn, tl)

        if L % tl:  # static: only needed when the last lane tile is ragged
            # Zero lanes >= L so the +1 neighbour at column L-1 matches the conv's
            # zero padding (gate values at garbage lanes are discarded on writeback).
            glane = pl.program_id(1) * tl + jax.lax.broadcasted_iota(
                jnp.int32, avg.shape, 1)
            valid = glane < L
            avg = jnp.where(valid, avg, 0.0)
            mx = jnp.where(valid, mx, 0.0)

        h = halo_ref[...]                                       # (bn, 1, 2) f32
        a_l = h[:, 0, 0:1]                                      # (bn, 1) left  tap (weights folded in)
        c_r = h[:, 0, 1:2]                                      # (bn, 1) right tap (weights folded in)

        # conv1d(k=3, pad=1, no bias) over the 2-channel (avg, max) signal:
        #   conv[l] = a[l-1] + (w01*avg + w11*mx)[l] + c[l+1]
        a = w_ref[0] * avg + w_ref[3] * mx                      # contribution of tap l-1
        c = w_ref[2] * avg + w_ref[5] * mx                      # contribution of tap l+1
        conv = (jnp.concatenate([a_l, a[:, :tl - 1]], axis=1)
                + w_ref[1] * avg + w_ref[4] * mx
                + jnp.concatenate([c[:, 1:], c_r], axis=1))

        gate = jax.nn.sigmoid(conv).astype(o_ref.dtype)         # (bn, tl)
        o_ref[...] = gate[:, None, :] * x_ref[...]              # broadcast over C, I/O dtype

    return kernel


def spatial_layer(x, w, *, tl=None, bn=None):
    """Spatial attention gate: sigmoid(conv1d_k3(cat[mean_C(x), max_C(x)])) * x.

    x: (N, C, L) array (f32 or bf16).
    w: (2, 3) Conv1d weight (squeezed from PyTorch's (1, 2, 3)); no bias.
    tl: optional lane-tile override (positive multiple of 128).
    bn: optional batch-tile override (must divide N).
    """
    N, C, L = x.shape
    lane = 128
    itemsize = jnp.dtype(x.dtype).itemsize
    sub = 8 * max(1, 4 // itemsize)                 # sublane packing: f32->8, bf16->16
    c_pad = _round_up(C, sub)
    f32 = jnp.float32

    # Generation-aware per-block byte budget (one (bn, C, tl) block, sublane-padded).
    try:
        vmem_cap = int(pltpu.get_tpu_info().vmem_capacity_bytes)
    except Exception:
        vmem_cap = 64 << 20                          # conservative (v7x-sized) fallback
    block_budget = (8 << 20) if vmem_cap >= (96 << 20) else (6 << 20)

    # Lane tile: biggest 128-multiple fitting the budget at bn = 1 (never below 128).
    if tl is None:
        tl_budget = max(lane, (block_budget // (c_pad * itemsize)) // lane * lane)
        tl = min(_round_up(L, lane), tl_budget)
    assert tl >= lane and tl % lane == 0, "tl must be a positive multiple of 128"
    num_t = pl.cdiv(L, tl)

    # Batch tile: largest divisor of N that fits the budget.
    if bn is None:
        bn = 1
        for d in range(N, 0, -1):
            if N % d == 0 and d * c_pad * tl * itemsize <= block_budget:
                bn = d
                break
        # v7x has two TensorCores: keep the "parallel" grid >= 2 steps when possible.
        if (N // bn) * num_t < 2:
            for d in range(bn - 1, 0, -1):
                if N % d == 0:
                    bn = d
                    break
    assert bn >= 1 and N % bn == 0, "bn must divide N"

    # Pre-reduced, conv-weighted halo taps (one column left/right of each lane tile;
    # zeros at the global edges = the conv's zero padding).  Tiny: (N, num_t, 1, 2) f32.
    wf = jnp.asarray(w, f32)                                       # (2, 3)
    if num_t > 1:
        ends = x[:, :, tl - 1:(num_t - 1) * tl:tl]                 # last col of tiles 0..num_t-2
        starts = x[:, :, tl:(num_t - 1) * tl + 1:tl]               # first col of tiles 1..num_t-1
        ends_avg = jnp.mean(ends.astype(f32), axis=1)              # (N, num_t-1)
        ends_max = jnp.max(ends.astype(f32), axis=1)
        starts_avg = jnp.mean(starts.astype(f32), axis=1)
        starts_max = jnp.max(starts.astype(f32), axis=1)
        zero = jnp.zeros((N, 1), f32)
        a_fill = jnp.concatenate(
            [zero, wf[0, 0] * ends_avg + wf[1, 0] * ends_max], axis=1)      # left taps
        c_fill = jnp.concatenate(
            [wf[0, 2] * starts_avg + wf[1, 2] * starts_max, zero], axis=1)  # right taps
        halo = jnp.stack([a_fill, c_fill], axis=-1)[:, :, None, :]          # (N, num_t, 1, 2)
    else:
        halo = jnp.zeros((N, 1, 1, 2), f32)

    w_flat = wf.reshape(6)

    block_bytes = bn * c_pad * tl * itemsize
    vmem_limit = int(min(vmem_cap * 3 // 4, max(32 << 20, 5 * block_bytes)))

    kernel = _make_kernel(L, tl, 1.0 / C)
    out = pl.pallas_call(
        kernel,
        out_shape=jax.ShapeDtypeStruct((N, C, L), x.dtype),
        grid=(N // bn, num_t),
        in_specs=[
            pl.BlockSpec(memory_space=pltpu.MemorySpace.SMEM),          # (6,) conv weights
            pl.BlockSpec((bn, C, tl), lambda n, t: (n, 0, t)),          # x lane tile
            pl.BlockSpec((bn, None, 1, 2), lambda n, t: (n, t, 0, 0)),  # halo taps
        ],
        out_specs=pl.BlockSpec((bn, C, tl), lambda n, t: (n, 0, t)),
        compiler_params=pltpu.CompilerParams(
            dimension_semantics=("parallel", "parallel"),
            vmem_limit_bytes=vmem_limit),
        cost_estimate=pl.CostEstimate(
            flops=7 * N * C * L + 12 * N * L,
            transcendentals=N * L,
            bytes_accessed=2 * N * C * L * itemsize),
    )(w_flat, x, halo)
    return out


def _reference(x, w):
    avg = jnp.mean(x, axis=1, keepdims=True)
    mx = jnp.max(x, axis=1, keepdims=True)
    s = jnp.concatenate([avg, mx], axis=1)                             # (N, 2, L)
    sp = jnp.pad(s, ((0, 0), (0, 0), (1, 1)))
    conv = (w[0, 0] * sp[:, 0:1, :-2] + w[0, 1] * sp[:, 0:1, 1:-1] + w[0, 2] * sp[:, 0:1, 2:]
            + w[1, 0] * sp[:, 1:2, :-2] + w[1, 1] * sp[:, 1:2, 1:-1] + w[1, 2] * sp[:, 1:2, 2:])
    return jax.nn.sigmoid(conv) * x


if __name__ == "__main__":
    key = jax.random.PRNGKey(0)
    kx, kw, kx2, kx3 = jax.random.split(key, 4)

    # Small shapes consistent with the module: (N, C, L) for the Conv1d path.
    N, C, L = 2, 4, 16
    x = jax.random.normal(kx, (N, C, L), dtype=jnp.float32)

    # PyTorch default Conv1d init: U(-1/sqrt(fan_in), 1/sqrt(fan_in)), fan_in = 2*3.
    bound = 1.0 / jnp.sqrt(6.0)
    w = jax.random.uniform(kw, (2, 3), dtype=jnp.float32, minval=-bound, maxval=bound)

    out = jax.block_until_ready(spatial_layer(x, w))
    ref = _reference(x, w)
    assert out.shape == (N, C, L)
    assert jnp.allclose(out, ref, atol=1e-5, rtol=1e-5), "mismatch (single ragged tile)"

    # Multi-tile L with a ragged last tile (exercises halos + tail masking).
    x2 = jax.random.normal(kx2, (2, 6, 300), dtype=jnp.float32)
    out2 = jax.block_until_ready(spatial_layer(x2, w, tl=128))
    assert out2.shape == (2, 6, 300)
    assert jnp.allclose(out2, _reference(x2, w), atol=1e-5, rtol=1e-5), "mismatch (ragged multi-tile)"

    # Multi-tile L that divides the lane tile exactly (exercises halos, no masking path).
    x3 = jax.random.normal(kx3, (2, 4, 256), dtype=jnp.float32)
    out3 = jax.block_until_ready(spatial_layer(x3, w, tl=128))
    assert out3.shape == (2, 4, 256)
    assert jnp.allclose(out3, _reference(x3, w), atol=1e-5, rtol=1e-5), "mismatch (aligned multi-tile)"

    print("KERNEL_OK")
</pallas_src>

<mosaic_0001>
module attributes {stable_mosaic.version = 11 : i64} {
  func.func @kernel(%arg0: i32, %arg1: i32, %arg2: memref<6xf32, #tpu.memory_space<smem>>, %arg3: memref<1x4x128xf32, #tpu.memory_space<vmem>>, %arg4: memref<1x1x1x2xf32, #tpu.memory_space<vmem>>, %arg5: memref<1x4x128xf32, #tpu.memory_space<vmem>>) attributes {dimension_semantics = [#tpu.dimension_semantics<parallel>, #tpu.dimension_semantics<parallel>], iteration_bounds = array<i64: 2, 1>, scalar_prefetch = 0 : i64, scratch_operands = 0 : i64, tpu.core_type = #tpu.core_type<tc>, window_params = [{transform_indices = @transform_0, window_bounds = array<i64: 6>}, {transform_indices = @transform_1, window_bounds = array<i64: 1, 4, 128>}, {transform_indices = @transform_2, window_bounds = array<i64: 1, 1, 1, 2>}, {transform_indices = @transform_3, window_bounds = array<i64: 1, 4, 128>}]} {
    %c0 = arith.constant 0 : index
    %c0_0 = arith.constant 0 : index
    %c0_1 = arith.constant 0 : index
    %0 = vector.load %arg3[%c0, %c0_0, %c0_1] : memref<1x4x128xf32, #tpu.memory_space<vmem>>, vector<1x4x128xf32>
    %cst = arith.constant dense<0.000000e+00> : vector<1x128xf32>
    %1 = vector.multi_reduction <add>, %0, %cst [1] : vector<1x4x128xf32> to vector<1x128xf32>
    %cst_2 = arith.constant 2.500000e-01 : f32
    %2 = vector.broadcast %cst_2 : f32 to vector<1x128xf32>
    %3 = arith.mulf %1, %2 : vector<1x128xf32>
    %cst_3 = arith.constant dense<0xFF800000> : vector<1x128xf32>
    %4 = vector.multi_reduction <maximumf>, %0, %cst_3 [1] : vector<1x4x128xf32> to vector<1x128xf32>
    %c128_i32 = arith.constant 128 : i32
    %5 = arith.muli %arg1, %c128_i32 : i32
    %6 = tpu.iota {dimensions = array<i32: 1>} : vector<1x128xi32>
    %7 = vector.broadcast %5 : i32 to vector<1x128xi32>
    %8 = arith.addi %7, %6 : vector<1x128xi32>
    %c16_i32 = arith.constant 16 : i32
    %9 = vector.broadcast %c16_i32 : i32 to vector<1x128xi32>
    %10 = arith.cmpi slt, %8, %9 : vector<1x128xi32>
    %cst_4 = arith.constant 0.000000e+00 : f32
    %11 = vector.broadcast %cst_4 : f32 to vector<1x128xf32>
    %12 = arith.select %10, %3, %11 : vector<1x128xi1>, vector<1x128xf32>
    %cst_5 = arith.constant 0.000000e+00 : f32
    %13 = vector.broadcast %cst_5 : f32 to vector<1x128xf32>
    %14 = arith.select %10, %4, %13 : vector<1x128xi1>, vector<1x128xf32>
    %c0_6 = arith.constant 0 : index
    %c0_7 = arith.constant 0 : index
    %c0_8 = arith.constant 0 : index
    %c0_9 = arith.constant 0 : index
    %15 = vector.load %arg4[%c0_6, %c0_7, %c0_8, %c0_9] : memref<1x1x1x2xf32, #tpu.memory_space<vmem>>, vector<1x1x1x2xf32>
    %16 = vector.shape_cast %15 : vector<1x1x1x2xf32> to vector<1x1x2xf32>
    %17 = vector.extract_strided_slice %16 {offsets = [0, 0, 0], sizes = [1, 1, 1], strides = [1, 1, 1]} : vector<1x1x2xf32> to vector<1x1x1xf32>
    %18 = vector.shape_cast %17 : vector<1x1x1xf32> to vector<1x1xf32>
    %19 = vector.extract_strided_slice %16 {offsets = [0, 0, 1], sizes = [1, 1, 1], strides = [1, 1, 1]} : vector<1x1x2xf32> to vector<1x1x1xf32>
    %20 = vector.shape_cast %19 : vector<1x1x1xf32> to vector<1x1xf32>
    %c0_10 = arith.constant 0 : index
    %21 = memref.load %arg2[%c0_10] : memref<6xf32, #tpu.memory_space<smem>>
    %22 = vector.broadcast %21 : f32 to vector<1x128xf32>
    %23 = arith.mulf %22, %12 : vector<1x128xf32>
    %c3 = arith.constant 3 : index
    %24 = memref.load %arg2[%c3] : memref<6xf32, #tpu.memory_space<smem>>
    %25 = vector.broadcast %24 : f32 to vector<1x128xf32>
    %26 = arith.mulf %25, %14 : vector<1x128xf32>
    %27 = arith.addf %23, %26 : vector<1x128xf32>
    %c2 = arith.constant 2 : index
    %28 = memref.load %arg2[%c2] : memref<6xf32, #tpu.memory_space<smem>>
    %29 = vector.broadcast %28 : f32 to vector<1x128xf32>
    %30 = arith.mulf %29, %12 : vector<1x128xf32>
    %c5 = arith.constant 5 : index
    %31 = memref.load %arg2[%c5] : memref<6xf32, #tpu.memory_space<smem>>
    %32 = vector.broadcast %31 : f32 to vector<1x128xf32>
    %33 = arith.mulf %32, %14 : vector<1x128xf32>
    %34 = arith.addf %30, %33 : vector<1x128xf32>
    %35 = vector.extract_strided_slice %27 {offsets = [0, 0], sizes = [1, 127], strides = [1, 1]} : vector<1x128xf32> to vector<1x127xf32>
    %36 = tpu.concatenate %18, %35 in 1 : vector<1x1xf32>, vector<1x127xf32> -> vector<1x128xf32>
    %c1 = arith.constant 1 : index
    %37 = memref.load %arg2[%c1] : memref<6xf32, #tpu.memory_space<smem>>
    %38 = vector.broadcast %37 : f32 to vector<1x128xf32>
    %39 = arith.mulf %38, %12 : vector<1x128xf32>
    %40 = arith.addf %36, %39 : vector<1x128xf32>
    %c4 = arith.constant 4 : index
    %41 = memref.load %arg2[%c4] : memref<6xf32, #tpu.memory_space<smem>>
    %42 = vector.broadcast %41 : f32 to vector<1x128xf32>
    %43 = arith.mulf %42, %14 : vector<1x128xf32>
    %44 = arith.addf %40, %43 : vector<1x128xf32>
    %45 = vector.extract_strided_slice %34 {offsets = [0, 1], sizes = [1, 127], strides = [1, 1]} : vector<1x128xf32> to vector<1x127xf32>
    %46 = tpu.concatenate %45, %20 in 1 : vector<1x127xf32>, vector<1x1xf32> -> vector<1x128xf32>
    %47 = arith.addf %44, %46 : vector<1x128xf32>
    %48 = arith.negf %47 : vector<1x128xf32>
    %49 = math.exp %48 : vector<1x128xf32>
    %cst_11 = arith.constant 1.000000e+00 : f32
    %50 = vector.broadcast %cst_11 : f32 to vector<1x128xf32>
    %51 = arith.addf %50, %49 : vector<1x128xf32>
    %52 = arith.divf %50, %51 : vector<1x128xf32>
    %53 = vector.shape_cast %52 : vector<1x128xf32> to vector<1x1x128xf32>
    %c0_12 = arith.constant 0 : index
    %c0_13 = arith.constant 0 : index
    %c0_14 = arith.constant 0 : index
    %54 = vector.load %arg3[%c0_12, %c0_13, %c0_14] : memref<1x4x128xf32, #tpu.memory_space<vmem>>, vector<1x4x128xf32>
    %55 = vector.broadcast %53 : vector<1x1x128xf32> to vector<1x4x128xf32>
    %56 = arith.mulf %55, %54 : vector<1x4x128xf32>
    %c0_15 = arith.constant 0 : index
    %c0_16 = arith.constant 0 : index
    %c0_17 = arith.constant 0 : index
    %57 = vector.load %arg5[%c0_15, %c0_16, %c0_17] : memref<1x4x128xf32, #tpu.memory_space<vmem>>, vector<1x4x128xf32>
    tpu.vector_store %arg5[%c0_15, %c0_16, %c0_17], %56 {strides = array<i32>} : memref<1x4x128xf32, #tpu.memory_space<vmem>>, vector<1x4x128xf32>,
    return
  }
  func.func @transform_0(%arg0: i32, %arg1: i32) -> i32 {
    %c0_i32 = arith.constant 0 : i32
    %c0_i32_0 = arith.constant 0 : i32
    return %c0_i32 : i32
  }
  func.func @transform_1(%arg0: i32, %arg1: i32) -> (i32, i32, i32) {
    %c0_i32 = arith.constant 0 : i32
    %c0_i32_0 = arith.constant 0 : i32
    return %arg0, %c0_i32, %arg1 : i32, i32, i32
  }
  func.func @transform_2(%arg0: i32, %arg1: i32) -> (i32, i32, i32, i32) {
    %c0_i32 = arith.constant 0 : i32
    %c0_i32_0 = arith.constant 0 : i32
    %c0_i32_1 = arith.constant 0 : i32
    return %arg0, %arg1, %c0_i32, %c0_i32_0 : i32, i32, i32, i32
  }
  func.func @transform_3(%arg0: i32, %arg1: i32) -> (i32, i32, i32) {
    %c0_i32 = arith.constant 0 : i32
    %c0_i32_0 = arith.constant 0 : i32
    return %arg0, %c0_i32, %arg1 : i32, i32, i32
  }
}

</mosaic_0001>

<llo_original>
// kernel: tpu_custom_call.1
$region0: #{tpu_custom_call.1}
  #allocation0 [shape = 'u32[]', space=smem, size = 0x4, offset = 0x4, fixed_abs, tag = 'smem constant byte address 0x4 - core index']
  #allocation1 [shape = 'u32[144,128]{1,0:T(1,128)}', space=vmem, size = 0x12000, scoped, tag = 'internal scratch']
  %s0 = inlined_call_operand.hbm [shape: f32[6], index: 0, kind: input, shape index: {}]
  %s1 = inlined_call_operand.hbm [shape: f32[2,4,16], index: 1, kind: input, shape index: {}]
  %s2 = inlined_call_operand.vmem [shape: f32[2,1,1,2], index: 2, kind: input, shape index: {}]
  %s3 = inlined_call_operand.hbm [shape: f32[2,4,16], index: 3, kind: output, shape index: {}]
  %s4 = sld [smem:[#allocation0]]
  $region53: #{tpu_custom_call.1} parent=0
    _
  %s6 = ssub.s32 1, %s4
  %s7 = scalar_select 0, %s6, %s4
  $region1: #{tpu_custom_call.1} parent=0
    #allocation2 [shape = 'u8[512]{0}', space=smem, size = 0x200, scoped, tag = 'input window, operand 0, single buffered']
    #allocation3 [shape = 's32[2]{0}', space=sflag, size = 0x8, scoped, tag = 'scoped memory for tpu_custom_call.1']
    #allocation4 [shape = 's32[2]{0}', space=sflag, size = 0x8, scoped, tag = 'scoped memory for tpu_custom_call.1']
    #allocation5 [shape = 's32[2]{0}', space=sflag, size = 0x8, scoped, tag = 'scoped memory for tpu_custom_call.1']
    #allocation6 [shape = 'u8[4096]{0}', space=vmem, size = 0x1000, scoped, tag = 'input window, operand 1']
    #allocation7 [shape = 'u8[4096]{0}', space=vmem, size = 0x1000, scoped, tag = 'output window, operand 0']
    %8 = vsyncpa [#allocation5], 0
    %9 = vsyncpa [#allocation3], 0
    %s10 = scalar_lea.sflag [#allocation3], 1
    %11 = vsyncpa %s10, 0
    %12 = vsyncpa [#allocation4], 0
    %s13 = scalar_lea.sflag [#allocation4], 1
    %14 = vsyncpa %s13, 0
    loop: start=0, step=1, limit=4
    $region2: #{tpu_custom_call.1} parent=1 // loop_pre_header
      _
    $region3: #{tpu_custom_call.1} parent=1 // loop_header
      %s16 = sphi 0, %s20
      %p17 = scmp.ge.s32.totalorder %s16, 4
      %s23 = sphi 0, %s35
      %s24 = sphi 0, %s31
      %s25 = sphi 0, %s23
      %s26 = sphi 0, %s24
      %s27 = sphi 0, %s25
      %s28 = sphi 0, %s26
      %s36 = sphi 0, %s36
      %s38 = sphi 0, %s36
      %s39 = sphi 0, %s38
      %s53 = sphi 0, %s39
      %s61 = sphi 0, %s63
      %s64 = sphi 0, %s61
      %s65 = sphi 0, %s64
      %s81 = sphi 0, %s65
      %s89 = sphi 0, %s91
      %s92 = sphi 0, %s89
      %s93 = sphi 0, %s92
      %s109 = sphi 0, %s93
      %s117 = sphi 0, %s119
      %s120 = sphi 0, %s117
      %s121 = sphi 0, %s120
      %s137 = sphi 0, %s121
    $region4: #{tpu_custom_call.1} parent=1 // loop_header_branch
      %19 = sbr.rel (%p17) target = $region8
    $region5: #{tpu_custom_call.1} parent=1 // loop_body
      %s21 = ssub.s32 %s16, 1
      %s22 = ssub.s32 %s16, 2
      %s29 = sadd.s32 1, %s24
      %p30 = scmp.ge.s32.totalorder %s29, 1
      %s31 = scalar_select %p30, 0, %s29
      %s32 = sadd.s32 1, %s23
      %s33 = scalar_select %p30, %s32, %s23
      %p34 = scmp.ge.s32.totalorder %s33, 2
      %s35 = scalar_select %p34, 0, %s33
      %s37 = sadd.s32 %s36, 1
      %p40 = scmp.eq.s32.totalorder %s16, 1
      %p41 = scmp.ne.s32.totalorder %s36, %s38
      %p42 = scmp.eq.s32.totalorder %s16, 0
      %p43 = por %p41, %p42
      %p44 = scmp.ne.s32.totalorder %s36, %s38
      %p45 = scmp.eq.s32.totalorder %s21, 1
      %p46 = por %p44, %p45
      %p47 = scmp.ne.s32.totalorder %s38, %s39
      %p48 = scmp.eq.s32.totalorder %s21, 0
      %p49 = por %p47, %p48
      %p50 = scmp.ne.s32.totalorder %s38, %s39
      %p51 = scmp.eq.s32.totalorder %s22, 1
      %p52 = por %p50, %p51
      %p54 = scmp.ne.s32.totalorder %s39, %s53
      %p55 = scmp.eq.s32.totalorder %s22, 0
      %p56 = por %p54, %p55
      %s57 = ssub.s32 %s23, %s35
      %s58 = ssub.s32 %s24, %s31
      %s59 = sor.u32 %s57, %s58
      %p60 = scmp.eq.s32.totalorder %s59, 0
      %s62 = sadd.s32 %s61, 1
      %s63 = scalar_select %p60, %s61, %s62
      %p66 = pneg %p60
      %p67 = scmp.eq.s32.totalorder %s16, 1
      %p68 = por %p66, %p67
      %p69 = scmp.ne.s32.totalorder %s61, %s64
      %p70 = scmp.eq.s32.totalorder %s16, 0
      %p71 = por %p69, %p70
      %p72 = scmp.ne.s32.totalorder %s61, %s64
      %p73 = scmp.eq.s32.totalorder %s21, 1
      %p74 = por %p72, %p73
      %p75 = scmp.ne.s32.totalorder %s64, %s65
      %p76 = scmp.eq.s32.totalorder %s21, 0
      %p77 = por %p75, %p76
      %p78 = scmp.ne.s32.totalorder %s64, %s65
      %p79 = scmp.eq.s32.totalorder %s22, 1
      %p80 = por %p78, %p79
      %p82 = scmp.ne.s32.totalorder %s65, %s81
      %p83 = scmp.eq.s32.totalorder %s22, 0
      %p84 = por %p82, %p83
      %s85 = ssub.s32 %s23, %s35
      %s86 = ssub.s32 %s24, %s31
      %s87 = sor.u32 %s85, %s86
      %p88 = scmp.eq.s32.totalorder %s87, 0
      %s90 = sadd.s32 %s89, 1
      %s91 = scalar_select %p88, %s89, %s90
      %p94 = pneg %p88
      %p95 = scmp.eq.s32.totalorder %s16, 1
      %p96 = por %p94, %p95
      %p97 = scmp.ne.s32.totalorder %s89, %s92
      %p98 = scmp.eq.s32.totalorder %s16, 0
      %p99 = por %p97, %p98
      %p100 = scmp.ne.s32.totalorder %s89, %s92
      %p101 = scmp.eq.s32.totalorder %s21, 1
      %p102 = por %p100, %p101
      %p103 = scmp.ne.s32.totalorder %s92, %s93
      %p104 = scmp.eq.s32.totalorder %s21, 0
      %p105 = por %p103, %p104
      %p106 = scmp.ne.s32.totalorder %s92, %s93
      %p107 = scmp.eq.s32.totalorder %s22, 1
      %p108 = por %p106, %p107
      %p110 = scmp.ne.s32.totalorder %s93, %s109
      %p111 = scmp.eq.s32.totalorder %s22, 0
      %p112 = por %p110, %p111
      %s113 = ssub.s32 %s23, %s35
      %s114 = ssub.s32 %s24, %s31
      %s115 = sor.u32 %s113, %s114
      %p116 = scmp.eq.s32.totalorder %s115, 0
      %s118 = sadd.s32 %s117, 1
      %s119 = scalar_select %p116, %s117, %s118
      %p122 = pneg %p116
      %p123 = scmp.eq.s32.totalorder %s16, 1
      %p124 = por %p122, %p123
      %p125 = scmp.ne.s32.totalorder %s117, %s120
      %p126 = scmp.eq.s32.totalorder %s16, 0
      %p127 = por %p125, %p126
      %p128 = scmp.ne.s32.totalorder %s117, %s120
      %p129 = scmp.eq.s32.totalorder %s21, 1
      %p130 = por %p128, %p129
      %p131 = scmp.ne.s32.totalorder %s120, %s121
      %p132 = scmp.eq.s32.totalorder %s21, 0
      %p133 = por %p131, %p132
      %p134 = scmp.ne.s32.totalorder %s120, %s121
      %p135 = scmp.eq.s32.totalorder %s22, 1
      %p136 = por %p134, %p135
      %p138 = scmp.ne.s32.totalorder %s121, %s137
      %p139 = scmp.eq.s32.totalorder %s22, 0
      %p140 = por %p138, %p139
      %p141 = scmp.le.s32.totalorder 1, %s16
      %p142 = scmp.lt.s32.totalorder %s16, 3
      %p143 = pnand %p141, %p142
      %p144 = pneg %p143
      // Predicated region
      $region9: #{tpu_custom_call.1} parent=5 // pred_check
        _
      $region10: #{tpu_custom_call.1} parent=5 // pred_check_branch
        %146 = sbr.rel (%p143) target = $region12
      $region11: #{tpu_custom_call.1} parent=5 // pred_region
        %s147 = ssub.s32 %s16, 1
        // Predicated region
        $region13: #{tpu_custom_call.1} parent=11 // pred_check
          %p148 = pneg %p49
        $region14: #{tpu_custom_call.1} parent=11 // pred_check_branch
          %150 = sbr.rel (%p148) target = $region16
        $region15: #{tpu_custom_call.1} parent=11 // pred_region
          %s152 = ssub.s32 16, 16
          %153 = vsyncadd [#allocation5], %s152
          %156 = dma.hbm_to_smem %s0, 16, [#allocation2], [#allocation5]
        $region16: #{tpu_custom_call.1} parent=11 // pred_fallthru
          _
      $region12: #{tpu_custom_call.1} parent=5 // pred_fallthru
        _
      %p157 = scmp.lt.s32.totalorder %s16, 2
      // Predicated region
      $region17: #{tpu_custom_call.1} parent=5 // pred_check
        %p158 = pneg %p157
      $region18: #{tpu_custom_call.1} parent=5 // pred_check_branch
        %160 = sbr.rel (%p158) target = $region20
      $region19: #{tpu_custom_call.1} parent=5 // pred_region
        // Predicated region
        $region21: #{tpu_custom_call.1} parent=19 // pred_check
          %p161 = pneg %p71
        $region22: #{tpu_custom_call.1} parent=19 // pred_check_branch
          %163 = sbr.rel (%p161) target = $region24
        $region23: #{tpu_custom_call.1} parent=19 // pred_region
          %s164 = sand.u32 %s61, 1
          %s165 = scalar_lea.sflag [#allocation3], %s164
          %s166 = sand.u32 %s61, 1
          %s167 = smul.addr %s166, 4
          %s168 = scalar_lea.vmem [#allocation6], %s167
          %s170 = ssub.s32 64, 64
          %171 = vsyncadd %s165, %s170
          %s172 = sadd.s32 %s24, %s23
          %s173 = smul.addr %s172, 64
          %s174 = scalar_lea.hbm %s1, %s173
          %s176 = sshll.u32 %s168, 4
          %s177 = int_to_ptr.vmem [resolvable:$true] %s176
          %179 = dma.hbm_to_vmem [thread:$0]  %s174, 64, %s177, %s165
        $region24: #{tpu_custom_call.1} parent=19 // pred_fallthru
          _
        // Predicated region
        $region25: #{tpu_custom_call.1} parent=19 // pred_check
          %p180 = pneg %p99
        $region26: #{tpu_custom_call.1} parent=19 // pred_check_branch
          %182 = sbr.rel (%p180) target = $region28
        $region27: #{tpu_custom_call.1} parent=19 // pred_region
          %p183 = scmp.lt.s32.totalorder %s23, 1
          %s184 = scalar_select %p183, %s23, 1
          %p185 = scmp.lt.s32.totalorder %s24, 0
          %s186 = scalar_select %p185, %s24, 0
          %s187 = sadd.s32 %s186, %s184
          %s188 = scalar_lea.vmem %s2, %s187
        $region28: #{tpu_custom_call.1} parent=19 // pred_fallthru
          _
      $region20: #{tpu_custom_call.1} parent=5 // pred_fallthru
        _
      %p189 = scmp.le.s32.totalorder 1, %s16
      %p190 = scmp.lt.s32.totalorder %s16, 3
      %p191 = pnand %p189, %p190
      %p192 = pneg %p191
      // Predicated region
      $region29: #{tpu_custom_call.1} parent=5 // pred_check
        _
      $region30: #{tpu_custom_call.1} parent=5 // pred_check_branch
        %194 = sbr.rel (%p191) target = $region32
      $region31: #{tpu_custom_call.1} parent=5 // pred_region
        %s195 = ssub.s32 %s16, 1
        // Predicated region
        $region33: #{tpu_custom_call.1} parent=31 // pred_check
          %p196 = pneg %p49
        $region34: #{tpu_custom_call.1} parent=31 // pred_check_branch
          %198 = sbr.rel (%p196) target = $region36
        $region35: #{tpu_custom_call.1} parent=31 // pred_region
          %199 = dma.done [#allocation5], 16
        $region36: #{tpu_custom_call.1} parent=31 // pred_fallthru
          _
        %s200 = sand.u32 %s64, 1
        %s201 = scalar_lea.sflag [#allocation3], %s200
        %s202 = sand.u32 %s64, 1
        %s203 = smul.addr %s202, 4
        %s204 = scalar_lea.vmem [#allocation6], %s203
        // Predicated region
        $region37: #{tpu_custom_call.1} parent=31 // pred_check
          %p205 = pneg %p77
        $region38: #{tpu_custom_call.1} parent=31 // pred_check_branch
          %207 = sbr.rel (%p205) target = $region40
        $region39: #{tpu_custom_call.1} parent=31 // pred_region
          %208 = dma.done %s201, 64
        $region40: #{tpu_custom_call.1} parent=31 // pred_fallthru
          _
        %209 = sfence
        %p210 = pneg %p49
        %p211 = pneg %p46
        %s212 = sand.u32 %s64, 1
        %s213 = scalar_lea.sflag [#allocation3], %s212
        %s214 = sand.u32 %s64, 1
        %s215 = smul.addr %s214, 4
        %s216 = scalar_lea.vmem [#allocation6], %s215
        %p217 = pneg %p77
        %p218 = pneg %p74
        %p219 = scmp.lt.s32.totalorder %s25, 1
        %s220 = scalar_select %p219, %s25, 1
        %p221 = scmp.lt.s32.totalorder %s26, 0
        %s222 = scalar_select %p221, %s26, 0
        %s223 = sadd.s32 %s222, %s220
        %s224 = scalar_lea.vmem %s2, %s223
        %p225 = pneg %p105
        %p226 = pneg %p102
        %p227 = pneg %p133
        %p228 = pneg %p130
        %s229 = sand.u32 %s120, 1
        %s230 = scalar_lea.sflag [#allocation4], %s229
        %s231 = sand.u32 %s120, 1
        %s232 = smul.addr %s231, 4
        %s233 = scalar_lea.vmem [#allocation7], %s232
        %p234 = scmp.lt.s32.totalorder %s25, 1
        %s235 = scalar_select %p234, %s25, 1
        %p236 = scmp.lt.s32.totalorder %s26, 0
        %s237 = scalar_select %p236, %s26, 0
        %s238 = sadd.s32 %s237, %s235
        %s239 = scalar_lea.vmem %s2, %s238
        %v240 = vld [vmem:[%s204] sm:$0xf]
        %vm241 = vcmask 1043456
        %v242 = vsel %vm241, %v240, 0.0
        %v243 = vrot.slane %v242, 4
        %v244 = vadd.f32 %v242, %v243
        %v245 = vrot.slane %v244, 2
        %v246 = vadd.f32 %v244, %v245
        %v247 = vrot.slane %v246, 1
        %v248 = vadd.f32 %v246, %v247
        %v249 = vmul.f32 %v248, 0.25
        %v250 = vsel %vm241, %v240, -inf
        %v251 = vrot.slane %v250, 4
        %v252 = vmax.f32 %v250, %v251
        %v253 = vrot.slane %v252, 2
        %v254 = vmax.f32 %v252, %v253
        %v255 = vrot.slane %v254, 1
        %v256 = vmax.f32 %v254, %v255
        %s257 = smul.u32 %s26, 128
        %v258 = vlaneseq
        %v259 = vand.u32 %v258, 127
        %v260 = vstv %s257
        %v261 = vadd.s32 %v260, %v259
        %vm262 = vcmp.lt.s32.totalorder %v261, 16
        %v263 = vsel %vm262, %v249, 0.0
        %v264 = vsel %vm262, %v256, 0.0
        %v265 = vld [vmem:[%s239] sm:$0x1]
        %s266 = sld [smem:[#allocation2]]
        %v267 = vstv %s266
        %v268 = vmul.f32 %v267, %v263
        %s269 = sld [smem:[#allocation2 + $0x3]]
        %v270 = vstv %s269
        %v271 = vmul.f32 %v270, %v264
        %v272 = vadd.f32 %v268, %v271
        %s273 = sld [smem:[#allocation2 + $0x2]]
        %v274 = vstv %s273
        %v275 = vmul.f32 %v274, %v263
        %s276 = sld [smem:[#allocation2 + $0x5]]
        %v277 = vstv %s276
        %v278 = vmul.f32 %v277, %v264
        %v279 = vadd.f32 %v275, %v278
        %281 = vrot.lane.b32.xlu0 %v272, 1
        %v282 = vpop.permute.xlu0 %281
        %vm284 = vcmask 7168
        %v285 = vsel %vm284, %v265, %v282
        %s286 = sld [smem:[#allocation2 + $0x1]]
        %v287 = vstv %s286
        %v288 = vmul.f32 %v287, %v263
        %v289 = vadd.f32 %v285, %v288
        %s290 = sld [smem:[#allocation2 + $0x4]]
        %v291 = vstv %s290
        %v292 = vmul.f32 %v291, %v264
        %v293 = vadd.f32 %v289, %v292
        %295 = vrot.lane.b32.xlu0 %v279, 127
        %v296 = vpop.permute.xlu0 %295
        %v299 = vlaneseq
        %v300 = vshrl.u32 %v299, 7
        %v301 = vsub.s32 0, %v300
        %v302 = vrot.slane %v265, %v301
        %303 = vrot.lane.b32.xlu0 %v302, 126
        %v304 = vpop.permute.xlu0 %303
        %vm306 = vcmask 1039360
        %v307 = vsel %vm306, %v296, %v304
        %v308 = vadd.f32 %v293, %v307
        %v309 = vxor.u32 %v308, 2147483648
        %v310 = vmul.f32 %v309, 1.442695
        %v311 = vpow.pop %v310
        %v312 = vadd.f32 %v311, 1.0
        %v313 = vrcp.pop %v312
        %v314 = vmul.f32 1.0, %v313
        %v315 = vlaneseq
        %v316 = vshrl.u32 %v315, 7
        %v317 = vsub.s32 0, %v316
        %v318 = vrot.slane %v314, %v317
        %v319 = vmul.f32 %v318, %v240
        %320 = vst [vmem:[%s233] sm:$0xf] %v319
        %s321 = sand.u32 %s120, 1
        %s322 = scalar_lea.sflag [#allocation4], %s321
        %s323 = sand.u32 %s120, 1
        %s324 = smul.addr %s323, 4
        %s325 = scalar_lea.vmem [#allocation7], %s324
        // Predicated region
        $region41: #{tpu_custom_call.1} parent=31 // pred_check
          %p326 = pneg %p130
        $region42: #{tpu_custom_call.1} parent=31 // pred_check_branch
          %328 = sbr.rel (%p326) target = $region44
        $region43: #{tpu_custom_call.1} parent=31 // pred_region
          %s330 = ssub.s32 64, 64
          %331 = vsyncadd %s322, %s330
          %s332 = sadd.s32 %s26, %s25
          %s333 = smul.addr %s332, 64
          %s334 = scalar_lea.hbm %s3, %s333
          %s336 = sshll.u32 %s325, 4
          %s337 = int_to_ptr.vmem [resolvable:$true] %s336
          %339 = dma.vmem_to_hbm [thread:$0]  %s337, 64, %s334, %s322
        $region44: #{tpu_custom_call.1} parent=31 // pred_fallthru
          _
      $region32: #{tpu_custom_call.1} parent=5 // pred_fallthru
        _
      %p340 = scmp.le.s32.totalorder 2, %s16
      // Predicated region
      $region45: #{tpu_custom_call.1} parent=5 // pred_check
        %p341 = pneg %p340
      $region46: #{tpu_custom_call.1} parent=5 // pred_check_branch
        %343 = sbr.rel (%p341) target = $region48
      $region47: #{tpu_custom_call.1} parent=5 // pred_region
        %s344 = ssub.s32 %s16, 2
        // Predicated region
        $region49: #{tpu_custom_call.1} parent=47 // pred_check
          %p345 = pneg %p136
        $region50: #{tpu_custom_call.1} parent=47 // pred_check_branch
          %347 = sbr.rel (%p345) target = $region52
        $region51: #{tpu_custom_call.1} parent=47 // pred_region
          %s348 = sand.u32 %s121, 1
          %s349 = scalar_lea.sflag [#allocation4], %s348
          %s350 = sand.u32 %s121, 1
          %s351 = smul.addr %s350, 4
          %s352 = scalar_lea.vmem [#allocation7], %s351
          %353 = dma.done %s349, 64
        $region52: #{tpu_custom_call.1} parent=47 // pred_fallthru
          _
      $region48: #{tpu_custom_call.1} parent=5 // pred_fallthru
        _
    $region6: #{tpu_custom_call.1} parent=1 // loop_footer
      %s20 = sadd.s32 1, %s16
    $region7: #{tpu_custom_call.1} parent=1 // loop_footer_branch
      %15 = sbr.rel target = $region3
    $region8: #{tpu_custom_call.1} parent=1 // loop_exit
      _
    %354 = vsyncpa [#allocation3], 1
    %s355 = scalar_lea.sflag [#allocation3], 1
    %356 = vsyncpa %s355, 1
    %357 = vsyncpa [#allocation4], 1
    %s358 = scalar_lea.sflag [#allocation4], 1
    %359 = vsyncpa %s358, 1
    %360 = vsyncpa [#allocation5], 1
    %s361 = scalar_lea.sflag [#allocation5], 1
    %362 = vsyncpa %s361, 1

</llo_original>
